<compile_context>
chip_gen: v5e
topology: v5e:2x2
jax: 0.10.0
libtpu: 0.0.40
codegen_flags: <defaults>
</compile_context>

<pallas_src>
import functools

import jax
import jax.numpy as jnp
from jax import lax
from jax.experimental import pallas as pl
from jax.experimental.pallas import tpu as pltpu


def _round_up(x, m):
    return ((x + m - 1) // m) * m


def _vq_kernel(x_ref, e_ref, e2_ref, q_ref, idx_ref, sse_ref, encsum_ref, *,
               num_embeddings, tile_n, n_valid, distance_in_bf16):
    """One tile of flattened inputs vs. the full codebook.

    x_ref:      (TN, D)   f32   flat inputs tile
    e_ref:      (K,  D)   f32   full codebook
    e2_ref:     (1,  K)   f32   precomputed ||e||^2 (hoisted out of the loop)
    q_ref:      (TN, D)   f32   quantized outputs tile
    idx_ref:    (TN, 1)   i32   selected code indices
    sse_ref:    (1, 1, 1) f32   per-tile sum of squared error
    encsum_ref: (1, 1, K) f32   per-tile column-sum of one-hot encodings
    """
    i = pl.program_id(0)

    x = x_ref[...]                      # (TN, D) f32
    e = e_ref[...]                      # (K, D)  f32
    e2 = e2_ref[...]                    # (1, K)  f32

    # distances for argmin: ||e||^2 - 2 x.e   (||x||^2 dropped; row-constant)
    if distance_in_bf16:
        xd = x.astype(jnp.bfloat16)
        ed = e.astype(jnp.bfloat16)
    else:
        xd, ed = x, e
    xe = lax.dot_general(xd, ed, (((1,), (1,)), ((), ())),
                         preferred_element_type=jnp.float32)   # (TN, K) on MXU
    dist = e2 - 2.0 * xe                                        # (TN, K)

    # argmin with first-occurrence tie-breaking (matches torch.argmin), then
    # build the one-hot matrix in VMEM (never written to HBM).
    min_val = jnp.min(dist, axis=1, keepdims=True)              # (TN, 1)
    col = lax.broadcasted_iota(jnp.int32, dist.shape, 1)        # (TN, K)
    idx = jnp.min(jnp.where(dist == min_val, col, num_embeddings),
                  axis=1, keepdims=True)                        # (TN, 1) i32
    enc = (col == idx).astype(jnp.float32)                      # (TN, K)

    # quantized = one_hot @ embedding  (f32 MXU -> exact codebook rows)
    q = jnp.dot(enc, e, preferred_element_type=jnp.float32)     # (TN, D)

    q_ref[...] = q
    idx_ref[...] = idx

    # Per-tile partial reductions (summed in the JAX wrapper).
    diff = q - x
    if n_valid is not None:
        # Mask out zero-padded remainder rows.
        row = i * tile_n + lax.broadcasted_iota(jnp.int32, (tile_n, 1), 0)
        valid = (row < n_valid).astype(jnp.float32)             # (TN, 1)
        enc = enc * valid
        diff = diff * valid
    sse_ref[...] = jnp.sum(diff * diff).reshape(1, 1, 1)
    encsum_ref[...] = jnp.sum(enc, axis=0).reshape(1, 1, num_embeddings)


def _pick_tile_n(tile_n, n_tokens, d, k, vmem_budget_bytes=24 * 1024 * 1024):
    """Clamp tile_n to the token count and a conservative VMEM budget."""
    tile_n = min(tile_n, _round_up(n_tokens, 8))
    tile_n = max(8, _round_up(tile_n, 8))

    def footprint(tn):
        # double-buffered pipeline I/O + in-kernel (tn, K) temporaries
        io = 2 * 4 * (tn * d + k * d + k + tn * d + tn + 1 + k)
        tmp = 4 * tn * k * 3            # dist, enc, headroom
        return io + tmp

    while tile_n > 8 and footprint(tile_n) > vmem_budget_bytes:
        tile_n = max(8, _round_up(tile_n // 2, 8))
    return tile_n


def vector_quantizer_ema_forward(inputs, embedding, *, commitment_cost,
                                 tile_n=512, distance_in_bf16=True):
    """Eval-mode forward of VectorQuantizerEMA.

    inputs:    (B, H, W, D) float32, channel-last (D == embedding_dim)
    embedding: (K, D)       float32 codebook
    returns (loss, quantized (B,H,W,D), perplexity, encodings (N,K))
    """
    input_shape = inputs.shape
    K, D = embedding.shape

    flat = inputs.reshape(-1, D).astype(jnp.float32)
    N = flat.shape[0]

    tile_n = _pick_tile_n(tile_n, N, D, K)
    num_tiles = pl.cdiv(N, tile_n)
    N_pad = num_tiles * tile_n
    if N_pad != N:
        flat_p = jnp.pad(flat, ((0, N_pad - N), (0, 0)))
        n_valid = N
    else:
        flat_p = flat
        n_valid = None                   # no masking needed (static)

    e_f32 = embedding.astype(jnp.float32)
    e2 = jnp.sum(e_f32 * e_f32, axis=1)[None, :]          # (1, K), hoisted

    kernel = functools.partial(
        _vq_kernel,
        num_embeddings=K,
        tile_n=tile_n,
        n_valid=n_valid,
        distance_in_bf16=distance_in_bf16,
    )

    cost = pl.CostEstimate(
        flops=4 * N_pad * K * D,                          # 2 matmuls
        transcendentals=0,
        bytes_accessed=4 * (2 * N_pad * D + K * D + K + N_pad
                            + num_tiles * (K + 1)),
    )

    q_pad, idx_pad, sse_parts, encsum_parts = pl.pallas_call(
        kernel,
        out_shape=(
            jax.ShapeDtypeStruct((N_pad, D), jnp.float32),
            jax.ShapeDtypeStruct((N_pad, 1), jnp.int32),
            jax.ShapeDtypeStruct((num_tiles, 1, 1), jnp.float32),
            jax.ShapeDtypeStruct((num_tiles, 1, K), jnp.float32),
        ),
        grid_spec=pltpu.PrefetchScalarGridSpec(
            num_scalar_prefetch=0,
            grid=(num_tiles,),
            in_specs=[
                pl.BlockSpec((tile_n, D), lambda i: (i, 0)),
                pl.BlockSpec((K, D), lambda i: (0, 0)),
                pl.BlockSpec((1, K), lambda i: (0, 0)),
            ],
            out_specs=[
                pl.BlockSpec((tile_n, D), lambda i: (i, 0)),
                pl.BlockSpec((tile_n, 1), lambda i: (i, 0)),
                pl.BlockSpec((1, 1, 1), lambda i: (i, 0, 0)),
                pl.BlockSpec((1, 1, K), lambda i: (i, 0, 0)),
            ],
        ),
        compiler_params=pltpu.CompilerParams(
            dimension_semantics=("parallel",),            # no resident state
            vmem_limit_bytes=32 * 1024 * 1024,
        ),
        cost_estimate=cost,
    )(flat_p, e_f32, e2)

    # --- cheap finalization in plain JAX ---
    q_flat = q_pad[:N]
    idx = idx_pad[:N, 0]
    sse = jnp.sum(sse_parts)
    enc_sum = jnp.sum(encsum_parts, axis=(0, 1))          # (K,)

    e_latent_loss = sse / jnp.float32(N * D)              # F.mse_loss
    loss = jnp.float32(commitment_cost) * e_latent_loss

    quantized = q_flat.reshape(input_shape)
    # straight-through estimator: forward value equals quantized
    quantized = inputs + lax.stop_gradient(quantized - inputs)

    avg_probs = enc_sum / jnp.float32(N)
    perplexity = jnp.exp(-jnp.sum(avg_probs * jnp.log(avg_probs + 1e-10)))

    # The module's API returns the dense one-hot matrix; build it outside the
    # kernel so the kernel itself never writes (N, K) f32 to HBM.
    encodings = jax.nn.one_hot(idx, K, dtype=jnp.float32)

    return loss, quantized, perplexity, encodings


if __name__ == "__main__":
    # Module hyperparameters (small synthetic shapes).
    num_embeddings = 128     # K
    embedding_dim = 32       # D
    commitment_cost = 0.25
    # decay / epsilon only affect the training-mode EMA update (not implemented)

    key = jax.random.PRNGKey(0)
    k_emb, k_x = jax.random.split(key)

    # _embedding.weight.data.normal_()  -> standard normal codebook
    embedding = jax.random.normal(k_emb, (num_embeddings, embedding_dim), jnp.float32)

    # layout: (B, H, W, D) channel-last input, D == embedding_dim
    B, H, W = 2, 12, 12                  # N = 288 tokens
    x = jax.random.normal(k_x, (B, H, W, embedding_dim), jnp.float32)

    # tile_n=128 here to exercise the multi-tile + remainder-masking path at
    # these toy shapes; real workloads use the default tile_n=512.
    fwd = jax.jit(functools.partial(vector_quantizer_ema_forward,
                                    commitment_cost=commitment_cost,
                                    tile_n=128))
    loss, quantized, perplexity, encodings = fwd(x, embedding)
    jax.block_until_ready((loss, quantized, perplexity, encodings))

    N = B * H * W
    assert quantized.shape == x.shape
    assert encodings.shape == (N, num_embeddings)
    assert bool(jnp.all(jnp.sum(encodings, axis=1) == 1.0))

    # quantized (forward value) must be the selected codebook rows
    idx = jnp.argmax(encodings, axis=1)
    q_rows = quantized.reshape(-1, embedding_dim)
    assert bool(jnp.allclose(q_rows, embedding[idx], atol=1e-5))

    # loss / perplexity must agree with the definitions recomputed in plain JAX
    flat = x.reshape(-1, embedding_dim)
    ref_loss = commitment_cost * jnp.mean((embedding[idx] - flat) ** 2)
    assert bool(jnp.allclose(loss, ref_loss, rtol=1e-4, atol=1e-6))
    avg_probs = jnp.mean(encodings, axis=0)
    ref_perp = jnp.exp(-jnp.sum(avg_probs * jnp.log(avg_probs + 1e-10)))
    assert bool(jnp.allclose(perplexity, ref_perp, rtol=1e-4, atol=1e-6))

    print("KERNEL_OK")
</pallas_src>

<mosaic_0001>
module attributes {stable_mosaic.version = 11 : i64} {
  func.func @_vq_kernel(%arg0: i32, %arg1: memref<128x32xf32, #tpu.memory_space<vmem>>, %arg2: memref<128x32xf32, #tpu.memory_space<vmem>>, %arg3: memref<1x128xf32, #tpu.memory_space<vmem>>, %arg4: memref<128x32xf32, #tpu.memory_space<vmem>>, %arg5: memref<128x1xi32, #tpu.memory_space<vmem>>, %arg6: memref<1x1x1xf32, #tpu.memory_space<vmem>>, %arg7: memref<1x1x128xf32, #tpu.memory_space<vmem>>) attributes {dimension_semantics = [#tpu.dimension_semantics<parallel>], iteration_bounds = array<i64: 3>, scalar_prefetch = 0 : i64, scratch_operands = 0 : i64, tpu.core_type = #tpu.core_type<tc>, window_params = [{transform_indices = @transform_0, window_bounds = array<i64: 128, 32>}, {pipeline_mode = #tpu.pipeline_mode<synchronous>, transform_indices = @transform_1, window_bounds = array<i64: 128, 32>}, {pipeline_mode = #tpu.pipeline_mode<synchronous>, transform_indices = @transform_2, window_bounds = array<i64: 1, 128>}, {transform_indices = @transform_3, window_bounds = array<i64: 128, 32>}, {transform_indices = @transform_4, window_bounds = array<i64: 128, 1>}, {transform_indices = @transform_5, window_bounds = array<i64: 1, 1, 1>}, {transform_indices = @transform_6, window_bounds = array<i64: 1, 1, 128>}]} {
    %c0 = arith.constant 0 : index
    %c0_0 = arith.constant 0 : index
    %0 = vector.load %arg1[%c0, %c0_0] : memref<128x32xf32, #tpu.memory_space<vmem>>, vector<128x32xf32>
    %c0_1 = arith.constant 0 : index
    %c0_2 = arith.constant 0 : index
    %1 = vector.load %arg2[%c0_1, %c0_2] : memref<128x32xf32, #tpu.memory_space<vmem>>, vector<128x32xf32>
    %c0_3 = arith.constant 0 : index
    %c0_4 = arith.constant 0 : index
    %2 = vector.load %arg3[%c0_3, %c0_4] : memref<1x128xf32, #tpu.memory_space<vmem>>, vector<1x128xf32>
    %3 = arith.truncf %0 : vector<128x32xf32> to vector<128x32xbf16>
    %4 = arith.truncf %1 : vector<128x32xf32> to vector<128x32xbf16>
    %cst = arith.constant dense<0.000000e+00> : vector<128x128xf32>
    %5 = tpu.matmul %3, %4, %cst {dimension_numbers = #tpu.dot_dimension_numbers<[1], [1], [0], [0], [0, 0, 1, 0], [], []>} : vector<128x32xbf16>, vector<128x32xbf16>, vector<128x128xf32> -> vector<128x128xf32>
    %cst_5 = arith.constant 2.000000e+00 : f32
    %6 = vector.broadcast %cst_5 : f32 to vector<128x128xf32>
    %7 = arith.mulf %6, %5 : vector<128x128xf32>
    %8 = vector.broadcast %2 : vector<1x128xf32> to vector<128x128xf32>
    %9 = arith.subf %8, %7 : vector<128x128xf32>
    %cst_6 = arith.constant dense<0x7F800000> : vector<128xf32>
    %10 = vector.multi_reduction <minimumf>, %9, %cst_6 [1] : vector<128x128xf32> to vector<128xf32>
    %11 = vector.shape_cast %10 : vector<128xf32> to vector<128x1xf32>
    %12 = tpu.iota {dimensions = array<i32: 1>} : vector<128x128xi32>
    %13 = vector.broadcast %11 : vector<128x1xf32> to vector<128x128xf32>
    %14 = arith.cmpf oeq, %9, %13 : vector<128x128xf32>
    %c128_i32 = arith.constant 128 : i32
    %15 = vector.broadcast %c128_i32 : i32 to vector<128x128xi32>
    %16 = arith.select %14, %12, %15 : vector<128x128xi1>, vector<128x128xi32>
    %cst_7 = arith.constant dense<2147483647> : vector<128xi32>
    %17 = vector.multi_reduction <minsi>, %16, %cst_7 [1] : vector<128x128xi32> to vector<128xi32>
    %18 = vector.shape_cast %17 : vector<128xi32> to vector<128x1xi32>
    %19 = vector.broadcast %18 : vector<128x1xi32> to vector<128x128xi32>
    %20 = arith.cmpi eq, %12, %19 : vector<128x128xi32>
    %21 = arith.extui %20 : vector<128x128xi1> to vector<128x128xi32>
    %22 = arith.sitofp %21 : vector<128x128xi32> to vector<128x128xf32>
    %cst_8 = arith.constant dense<0.000000e+00> : vector<128x32xf32>
    %23 = tpu.matmul %22, %1, %cst_8 {dimension_numbers = #tpu.dot_dimension_numbers<[1], [0], [0], [1], [0, 0, 1, 1], [], []>} : vector<128x128xf32>, vector<128x32xf32>, vector<128x32xf32> -> vector<128x32xf32>
    %c0_9 = arith.constant 0 : index
    %c0_10 = arith.constant 0 : index
    %24 = vector.load %arg4[%c0_9, %c0_10] : memref<128x32xf32, #tpu.memory_space<vmem>>, vector<128x32xf32>
    tpu.vector_store %arg4[%c0_9, %c0_10], %23 {strides = array<i32>} : memref<128x32xf32, #tpu.memory_space<vmem>>, vector<128x32xf32>,
    %c0_11 = arith.constant 0 : index
    %c0_12 = arith.constant 0 : index
    %25 = vector.load %arg5[%c0_11, %c0_12] : memref<128x1xi32, #tpu.memory_space<vmem>>, vector<128x1xi32>
    tpu.vector_store %arg5[%c0_11, %c0_12], %18 {strides = array<i32>} : memref<128x1xi32, #tpu.memory_space<vmem>>, vector<128x1xi32>,
    %26 = arith.subf %23, %0 : vector<128x32xf32>
    %c128_i32_13 = arith.constant 128 : i32
    %27 = arith.muli %arg0, %c128_i32_13 : i32
    %28 = tpu.iota {dimensions = array<i32: 0>} : vector<128x1xi32>
    %29 = vector.broadcast %27 : i32 to vector<128x1xi32>
    %30 = arith.addi %29, %28 : vector<128x1xi32>
    %c288_i32 = arith.constant 288 : i32
    %31 = vector.broadcast %c288_i32 : i32 to vector<128x1xi32>
    %32 = arith.cmpi slt, %30, %31 : vector<128x1xi32>
    %33 = arith.extui %32 : vector<128x1xi1> to vector<128x1xi32>
    %34 = arith.sitofp %33 : vector<128x1xi32> to vector<128x1xf32>
    %35 = vector.broadcast %34 : vector<128x1xf32> to vector<128x128xf32>
    %36 = arith.mulf %22, %35 : vector<128x128xf32>
    %37 = vector.broadcast %34 : vector<128x1xf32> to vector<128x32xf32>
    %38 = arith.mulf %26, %37 : vector<128x32xf32>
    %39 = arith.mulf %38, %38 : vector<128x32xf32>
    %40 = vector.shape_cast %39 : vector<128x32xf32> to vector<1x128x32xf32>
    %cst_14 = arith.constant dense<0.000000e+00> : vector<1xf32>
    %41 = vector.multi_reduction <add>, %40, %cst_14 [1, 2] : vector<1x128x32xf32> to vector<1xf32>
    %42 = vector.shape_cast %41 : vector<1xf32> to vector<1x1x1xf32>
    %43 = vector.extract %42[0, 0, 0] : f32 from vector<1x1x1xf32>
    %44 = vector.broadcast %43 : f32 to vector<1x1x1xf32>
    %c0_15 = arith.constant 0 : index
    %c0_16 = arith.constant 0 : index
    %c0_17 = arith.constant 0 : index
    %45 = vector.load %arg6[%c0_15, %c0_16, %c0_17] : memref<1x1x1xf32, #tpu.memory_space<vmem>>, vector<1x1x1xf32>
    tpu.vector_store %arg6[%c0_15, %c0_16, %c0_17], %44 {strides = array<i32>} : memref<1x1x1xf32, #tpu.memory_space<vmem>>, vector<1x1x1xf32>,
    %cst_18 = arith.constant dense<0.000000e+00> : vector<128xf32>
    %46 = vector.multi_reduction <add>, %36, %cst_18 [0] : vector<128x128xf32> to vector<128xf32>
    %47 = vector.shape_cast %46 : vector<128xf32> to vector<1x1x128xf32>
    %c0_19 = arith.constant 0 : index
    %c0_20 = arith.constant 0 : index
    %c0_21 = arith.constant 0 : index
    %48 = vector.load %arg7[%c0_19, %c0_20, %c0_21] : memref<1x1x128xf32, #tpu.memory_space<vmem>>, vector<1x1x128xf32>
    tpu.vector_store %arg7[%c0_19, %c0_20, %c0_21], %47 {strides = array<i32>} : memref<1x1x128xf32, #tpu.memory_space<vmem>>, vector<1x1x128xf32>,
    return
  }
  func.func @transform_0(%arg0: i32) -> (i32, i32) {
    %c0_i32 = arith.constant 0 : i32
    %c0_i32_0 = arith.constant 0 : i32
    return %arg0, %c0_i32 : i32, i32
  }
  func.func @transform_1(%arg0: i32) -> (i32, i32) {
    %c0_i32 = arith.constant 0 : i32
    %c0_i32_0 = arith.constant 0 : i32
    %c0_i32_1 = arith.constant 0 : i32
    return %c0_i32, %c0_i32_0 : i32, i32
  }
  func.func @transform_2(%arg0: i32) -> (i32, i32) {
    %c0_i32 = arith.constant 0 : i32
    %c0_i32_0 = arith.constant 0 : i32
    %c0_i32_1 = arith.constant 0 : i32
    return %c0_i32, %c0_i32_0 : i32, i32
  }
  func.func @transform_3(%arg0: i32) -> (i32, i32) {
    %c0_i32 = arith.constant 0 : i32
    %c0_i32_0 = arith.constant 0 : i32
    return %arg0, %c0_i32 : i32, i32
  }
  func.func @transform_4(%arg0: i32) -> (i32, i32) {
    %c0_i32 = arith.constant 0 : i32
    %c0_i32_0 = arith.constant 0 : i32
    return %arg0, %c0_i32 : i32, i32
  }
  func.func @transform_5(%arg0: i32) -> (i32, i32, i32) {
    %c0_i32 = arith.constant 0 : i32
    %c0_i32_0 = arith.constant 0 : i32
    %c0_i32_1 = arith.constant 0 : i32
    return %arg0, %c0_i32, %c0_i32_0 : i32, i32, i32
  }
  func.func @transform_6(%arg0: i32) -> (i32, i32, i32) {
    %c0_i32 = arith.constant 0 : i32
    %c0_i32_0 = arith.constant 0 : i32
    %c0_i32_1 = arith.constant 0 : i32
    return %arg0, %c0_i32, %c0_i32_0 : i32, i32, i32
  }
}

</mosaic_0001>

<llo_original>
// kernel: vector_quantizer_ema_forward.1
$region0: #{vector_quantizer_ema_forward.1}
  #allocation0 [shape = 'u32[]', space=smem, size = 0x4, offset = 0x4, fixed_abs, tag = 'smem constant byte address 0x4 - core index']
  #allocation1 [shape = 'u32[72,128]{1,0:T(1,128)}', space=vmem, size = 0x9000, scoped, tag = 'internal scratch']
  %s0 = inlined_call_operand.vmem [shape: f32[384,32], index: 0, kind: input, shape index: {}]
  %s1 = inlined_call_operand.vmem [shape: f32[128,32], index: 1, kind: input, shape index: {}]
  %s2 = inlined_call_operand.vmem [shape: f32[1,128], index: 2, kind: input, shape index: {}]
  %s3 = inlined_call_operand.vmem [shape: f32[384,32], index: 3, kind: output, shape index: {0}]
  %s4 = inlined_call_operand.vmem [shape: s32[384,1], index: 4, kind: output, shape index: {1}]
  %s5 = inlined_call_operand.vmem [shape: f32[3,1,1], index: 5, kind: output, shape index: {2}]
  %s6 = inlined_call_operand.vmem [shape: f32[3,1,128], index: 6, kind: output, shape index: {3}]
  %7 = xla_tuple %s3, %s4, %s5, %s6
  %s8 = sld [smem:[#allocation0]]
  $region69: #{vector_quantizer_ema_forward.1} parent=0
    _
  %s10 = ssub.s32 1, %s8
  %s11 = scalar_select 0, %s10, %s8
  loop: start=0, step=1, limit=5
  $region2: #{vector_quantizer_ema_forward.1} parent=0 // loop_pre_header
    _
  $region3: #{vector_quantizer_ema_forward.1} parent=0 // loop_header
    %s13 = sphi 0, %s17
    %p14 = scmp.ge.s32.totalorder %s13, 5
    %s23 = sphi 0, %s25
    %s26 = sphi 0, %s23
    %s27 = sphi 0, %s26
    %s43 = sphi 0, %s27
    %s47 = sphi 0, %s47
    %s49 = sphi 0, %s47
    %s50 = sphi 0, %s49
    %s64 = sphi 0, %s50
    %s68 = sphi 0, %s68
    %s70 = sphi 0, %s68
    %s71 = sphi 0, %s70
    %s85 = sphi 0, %s71
    %s91 = sphi 0, %s93
    %s94 = sphi 0, %s91
    %s95 = sphi 0, %s94
    %s111 = sphi 0, %s95
    %s117 = sphi 0, %s119
    %s120 = sphi 0, %s117
    %s121 = sphi 0, %s120
    %s137 = sphi 0, %s121
    %s143 = sphi 0, %s145
    %s146 = sphi 0, %s143
    %s147 = sphi 0, %s146
    %s163 = sphi 0, %s147
    %s169 = sphi 0, %s171
    %s172 = sphi 0, %s169
    %s173 = sphi 0, %s172
    %s189 = sphi 0, %s173
  $region4: #{vector_quantizer_ema_forward.1} parent=0 // loop_header_branch
    %16 = sbr.rel (%p14) target = $region8
  $region5: #{vector_quantizer_ema_forward.1} parent=0 // loop_body
    %s18 = ssub.s32 %s13, 1
    %s19 = ssub.s32 %s13, 2
    %s20 = sadd.s32 %s13, 1
    %s21 = ssub.s32 %s13, %s20
    %p22 = scmp.eq.s32.totalorder %s21, 0
    %s24 = sadd.s32 %s23, 1
    %s25 = scalar_select %p22, %s23, %s24
    %p28 = pneg %p22
    %p29 = scmp.eq.s32.totalorder %s13, 2
    %p30 = por %p28, %p29
    %p31 = scmp.ne.s32.totalorder %s23, %s26
    %p32 = scmp.eq.s32.totalorder %s13, 0
    %p33 = por %p31, %p32
    %p34 = scmp.ne.s32.totalorder %s23, %s26
    %p35 = scmp.eq.s32.totalorder %s18, 2
    %p36 = por %p34, %p35
    %p37 = scmp.ne.s32.totalorder %s26, %s27
    %p38 = scmp.eq.s32.totalorder %s18, 0
    %p39 = por %p37, %p38
    %p40 = scmp.ne.s32.totalorder %s26, %s27
    %p41 = scmp.eq.s32.totalorder %s19, 2
    %p42 = por %p40, %p41
    %p44 = scmp.ne.s32.totalorder %s27, %s43
    %p45 = scmp.eq.s32.totalorder %s19, 0
    %p46 = por %p44, %p45
    %s48 = sadd.s32 %s47, 1
    %p51 = scmp.eq.s32.totalorder %s13, 2
    %p52 = scmp.ne.s32.totalorder %s47, %s49
    %p53 = scmp.eq.s32.totalorder %s13, 0
    %p54 = por %p52, %p53
    %p55 = scmp.ne.s32.totalorder %s47, %s49
    %p56 = scmp.eq.s32.totalorder %s18, 2
    %p57 = por %p55, %p56
    %p58 = scmp.ne.s32.totalorder %s49, %s50
    %p59 = scmp.eq.s32.totalorder %s18, 0
    %p60 = por %p58, %p59
    %p61 = scmp.ne.s32.totalorder %s49, %s50
    %p62 = scmp.eq.s32.totalorder %s19, 2
    %p63 = por %p61, %p62
    %p65 = scmp.ne.s32.totalorder %s50, %s64
    %p66 = scmp.eq.s32.totalorder %s19, 0
    %p67 = por %p65, %p66
    %s69 = sadd.s32 %s68, 1
    %p72 = scmp.eq.s32.totalorder %s13, 2
    %p73 = scmp.ne.s32.totalorder %s68, %s70
    %p74 = scmp.eq.s32.totalorder %s13, 0
    %p75 = por %p73, %p74
    %p76 = scmp.ne.s32.totalorder %s68, %s70
    %p77 = scmp.eq.s32.totalorder %s18, 2
    %p78 = por %p76, %p77
    %p79 = scmp.ne.s32.totalorder %s70, %s71
    %p80 = scmp.eq.s32.totalorder %s18, 0
    %p81 = por %p79, %p80
    %p82 = scmp.ne.s32.totalorder %s70, %s71
    %p83 = scmp.eq.s32.totalorder %s19, 2
    %p84 = por %p82, %p83
    %p86 = scmp.ne.s32.totalorder %s71, %s85
    %p87 = scmp.eq.s32.totalorder %s19, 0
    %p88 = por %p86, %p87
    %s89 = ssub.s32 %s13, %s20
    %p90 = scmp.eq.s32.totalorder %s89, 0
    %s92 = sadd.s32 %s91, 1
    %s93 = scalar_select %p90, %s91, %s92
    %p96 = pneg %p90
    %p97 = scmp.eq.s32.totalorder %s13, 2
    %p98 = por %p96, %p97
    %p99 = scmp.ne.s32.totalorder %s91, %s94
    %p100 = scmp.eq.s32.totalorder %s13, 0
    %p101 = por %p99, %p100
    %p102 = scmp.ne.s32.totalorder %s91, %s94
    %p103 = scmp.eq.s32.totalorder %s18, 2
    %p104 = por %p102, %p103
    %p105 = scmp.ne.s32.totalorder %s94, %s95
    %p106 = scmp.eq.s32.totalorder %s18, 0
    %p107 = por %p105, %p106
    %p108 = scmp.ne.s32.totalorder %s94, %s95
    %p109 = scmp.eq.s32.totalorder %s19, 2
    %p110 = por %p108, %p109
    %p112 = scmp.ne.s32.totalorder %s95, %s111
    %p113 = scmp.eq.s32.totalorder %s19, 0
    %p114 = por %p112, %p113
    %s115 = ssub.s32 %s13, %s20
    %p116 = scmp.eq.s32.totalorder %s115, 0
    %s118 = sadd.s32 %s117, 1
    %s119 = scalar_select %p116, %s117, %s118
    %p122 = pneg %p116
    %p123 = scmp.eq.s32.totalorder %s13, 2
    %p124 = por %p122, %p123
    %p125 = scmp.ne.s32.totalorder %s117, %s120
    %p126 = scmp.eq.s32.totalorder %s13, 0
    %p127 = por %p125, %p126
    %p128 = scmp.ne.s32.totalorder %s117, %s120
    %p129 = scmp.eq.s32.totalorder %s18, 2
    %p130 = por %p128, %p129
    %p131 = scmp.ne.s32.totalorder %s120, %s121
    %p132 = scmp.eq.s32.totalorder %s18, 0
    %p133 = por %p131, %p132
    %p134 = scmp.ne.s32.totalorder %s120, %s121
    %p135 = scmp.eq.s32.totalorder %s19, 2
    %p136 = por %p134, %p135
    %p138 = scmp.ne.s32.totalorder %s121, %s137
    %p139 = scmp.eq.s32.totalorder %s19, 0
    %p140 = por %p138, %p139
    %s141 = ssub.s32 %s13, %s20
    %p142 = scmp.eq.s32.totalorder %s141, 0
    %s144 = sadd.s32 %s143, 1
    %s145 = scalar_select %p142, %s143, %s144
    %p148 = pneg %p142
    %p149 = scmp.eq.s32.totalorder %s13, 2
    %p150 = por %p148, %p149
    %p151 = scmp.ne.s32.totalorder %s143, %s146
    %p152 = scmp.eq.s32.totalorder %s13, 0
    %p153 = por %p151, %p152
    %p154 = scmp.ne.s32.totalorder %s143, %s146
    %p155 = scmp.eq.s32.totalorder %s18, 2
    %p156 = por %p154, %p155
    %p157 = scmp.ne.s32.totalorder %s146, %s147
    %p158 = scmp.eq.s32.totalorder %s18, 0
    %p159 = por %p157, %p158
    %p160 = scmp.ne.s32.totalorder %s146, %s147
    %p161 = scmp.eq.s32.totalorder %s19, 2
    %p162 = por %p160, %p161
    %p164 = scmp.ne.s32.totalorder %s147, %s163
    %p165 = scmp.eq.s32.totalorder %s19, 0
    %p166 = por %p164, %p165
    %s167 = ssub.s32 %s13, %s20
    %p168 = scmp.eq.s32.totalorder %s167, 0
    %s170 = sadd.s32 %s169, 1
    %s171 = scalar_select %p168, %s169, %s170
    %p174 = pneg %p168
    %p175 = scmp.eq.s32.totalorder %s13, 2
    %p176 = por %p174, %p175
    %p177 = scmp.ne.s32.totalorder %s169, %s172
    %p178 = scmp.eq.s32.totalorder %s13, 0
    %p179 = por %p177, %p178
    %p180 = scmp.ne.s32.totalorder %s169, %s172
    %p181 = scmp.eq.s32.totalorder %s18, 2
    %p182 = por %p180, %p181
    %p183 = scmp.ne.s32.totalorder %s172, %s173
    %p184 = scmp.eq.s32.totalorder %s18, 0
    %p185 = por %p183, %p184
    %p186 = scmp.ne.s32.totalorder %s172, %s173
    %p187 = scmp.eq.s32.totalorder %s19, 2
    %p188 = por %p186, %p187
    %p190 = scmp.ne.s32.totalorder %s173, %s189
    %p191 = scmp.eq.s32.totalorder %s19, 0
    %p192 = por %p190, %p191
    %p193 = scmp.le.s32.totalorder 1, %s13
    %p194 = scmp.lt.s32.totalorder %s13, 4
    %p195 = pnand %p193, %p194
    %p196 = pneg %p195
    // Predicated region
    $region9: #{vector_quantizer_ema_forward.1} parent=5 // pred_check
      _
    $region10: #{vector_quantizer_ema_forward.1} parent=5 // pred_check_branch
      %198 = sbr.rel (%p195) target = $region12
    $region11: #{vector_quantizer_ema_forward.1} parent=5 // pred_region
      %s199 = ssub.s32 %s13, 1
      // Predicated region
      $region13: #{vector_quantizer_ema_forward.1} parent=11 // pred_check
        %p200 = pneg %p60
      $region14: #{vector_quantizer_ema_forward.1} parent=11 // pred_check_branch
        %202 = sbr.rel (%p200) target = $region16
      $region15: #{vector_quantizer_ema_forward.1} parent=11 // pred_region
        _
      $region16: #{vector_quantizer_ema_forward.1} parent=11 // pred_fallthru
        _
      // Predicated region
      $region17: #{vector_quantizer_ema_forward.1} parent=11 // pred_check
        %p203 = pneg %p81
      $region18: #{vector_quantizer_ema_forward.1} parent=11 // pred_check_branch
        %205 = sbr.rel (%p203) target = $region20
      $region19: #{vector_quantizer_ema_forward.1} parent=11 // pred_region
        _
      $region20: #{vector_quantizer_ema_forward.1} parent=11 // pred_fallthru
        _
    $region12: #{vector_quantizer_ema_forward.1} parent=5 // pred_fallthru
      _
    %p206 = scmp.lt.s32.totalorder %s13, 3
    // Predicated region
    $region21: #{vector_quantizer_ema_forward.1} parent=5 // pred_check
      %p207 = pneg %p206
    $region22: #{vector_quantizer_ema_forward.1} parent=5 // pred_check_branch
      %209 = sbr.rel (%p207) target = $region24
    $region23: #{vector_quantizer_ema_forward.1} parent=5 // pred_region
      // Predicated region
      $region25: #{vector_quantizer_ema_forward.1} parent=23 // pred_check
        %p210 = pneg %p33
      $region26: #{vector_quantizer_ema_forward.1} parent=23 // pred_check_branch
        %212 = sbr.rel (%p210) target = $region28
      $region27: #{vector_quantizer_ema_forward.1} parent=23 // pred_region
        %s213 = smul.u32 16, %s13
        %p214 = scmp.lt.s32.totalorder %s213, 47
        %s215 = scalar_select %p214, %s213, 47
        %s216 = smul.addr %s215, 8
        %s217 = scalar_lea.vmem %s0, %s216
        %s218 = smul.u32 16, %s13
      $region28: #{vector_quantizer_ema_forward.1} parent=23 // pred_fallthru
        _
    $region24: #{vector_quantizer_ema_forward.1} parent=5 // pred_fallthru
      _
    %p219 = scmp.le.s32.totalorder 1, %s13
    %p220 = scmp.lt.s32.totalorder %s13, 4
    %p221 = pnand %p219, %p220
    %p222 = pneg %p221
    // Predicated region
    $region29: #{vector_quantizer_ema_forward.1} parent=5 // pred_check
      _
    $region30: #{vector_quantizer_ema_forward.1} parent=5 // pred_check_branch
      %224 = sbr.rel (%p221) target = $region32
    $region31: #{vector_quantizer_ema_forward.1} parent=5 // pred_region
      %s225 = ssub.s32 %s13, 1
      %s226 = smul.u32 16, %s18
      %p227 = scmp.lt.s32.totalorder %s226, 47
      %s228 = scalar_select %p227, %s226, 47
      %s229 = smul.addr %s228, 8
      %s230 = scalar_lea.vmem %s0, %s229
      %p231 = pneg %p39
      %p232 = pneg %p36
      %p233 = pneg %p60
      %p234 = pneg %p57
      %p235 = pneg %p81
      %p236 = pneg %p78
      %p237 = pneg %p107
      %p238 = pneg %p104
      %s239 = smul.u32 16, %s18
      %p240 = scmp.lt.s32.totalorder %s239, 47
      %s241 = scalar_select %p240, %s239, 47
      %s242 = smul.addr %s241, 8
      %s243 = scalar_lea.vmem %s3, %s242
      %p244 = pneg %p133
      %p245 = pneg %p130
      %s246 = smul.u32 16, %s18
      %p247 = scmp.lt.s32.totalorder %s246, 47
      %s248 = scalar_select %p247, %s246, 47
      %s249 = smul.addr %s248, 8
      %s250 = scalar_lea.vmem %s4, %s249
      %p251 = pneg %p159
      %p252 = pneg %p156
      %p253 = scmp.lt.s32.totalorder %s18, 2
      %s254 = scalar_select %p253, %s18, 2
      %s255 = scalar_lea.vmem %s5, %s254
      %p256 = pneg %p185
      %p257 = pneg %p182
      %p258 = scmp.lt.s32.totalorder %s18, 2
      %s259 = scalar_select %p258, %s18, 2
      %s260 = scalar_lea.vmem %s6, %s259
      %s261 = smul.u32 16, %s18
      %p262 = scmp.lt.s32.totalorder %s261, 47
      %s263 = scalar_select %p262, %s261, 47
      %s264 = smul.addr %s263, 8
      %s265 = scalar_lea.vmem %s0, %s264
      %s266 = smul.u32 16, %s18
      %s267 = smul.u32 16, %s18
      %p268 = scmp.lt.s32.totalorder %s267, 47
      %s269 = scalar_select %p268, %s267, 47
      %s270 = smul.addr %s269, 8
      %s271 = scalar_lea.vmem %s3, %s270
      %s272 = smul.u32 16, %s18
      %s273 = smul.u32 16, %s18
      %p274 = scmp.lt.s32.totalorder %s273, 47
      %s275 = scalar_select %p274, %s273, 47
      %s276 = smul.addr %s275, 8
      %s277 = scalar_lea.vmem %s4, %s276
      %s278 = smul.u32 16, %s18
      %p279 = scmp.lt.s32.totalorder %s18, 2
      %s280 = scalar_select %p279, %s18, 2
      %s281 = scalar_lea.vmem %s5, %s280
      %p282 = scmp.lt.s32.totalorder %s18, 2
      %s283 = scalar_select %p282, %s18, 2
      %s284 = scalar_lea.vmem %s6, %s283
      %v285 = vld [vmem:[%s265] sm:$0xff]
      %v286 = vld [vmem:[%s265 + $0x8] sm:$0xff]
      %v287 = vld [vmem:[%s265 + $0x10] sm:$0xff]
      %v288 = vld [vmem:[%s265 + $0x18] sm:$0xff]
      %v289 = vld [vmem:[%s265 + $0x20] sm:$0xff]
      %v290 = vld [vmem:[%s265 + $0x28] sm:$0xff]
      %v291 = vld [vmem:[%s265 + $0x30] sm:$0xff]
      %v292 = vld [vmem:[%s265 + $0x38] sm:$0xff]
      %v293 = vld [vmem:[%s265 + $0x40] sm:$0xff]
      %v294 = vld [vmem:[%s265 + $0x48] sm:$0xff]
      %v295 = vld [vmem:[%s265 + $0x50] sm:$0xff]
      %v296 = vld [vmem:[%s265 + $0x58] sm:$0xff]
      %v297 = vld [vmem:[%s265 + $0x60] sm:$0xff]
      %v298 = vld [vmem:[%s265 + $0x68] sm:$0xff]
      %v299 = vld [vmem:[%s265 + $0x70] sm:$0xff]
      %v300 = vld [vmem:[%s265 + $0x78] sm:$0xff]
      %v301 = vld [vmem:[%s1] sm:$0xff]
      %v302 = vld [vmem:[%s1 + $0x8] sm:$0xff]
      %v303 = vld [vmem:[%s1 + $0x10] sm:$0xff]
      %v304 = vld [vmem:[%s1 + $0x18] sm:$0xff]
      %v305 = vld [vmem:[%s1 + $0x20] sm:$0xff]
      %v306 = vld [vmem:[%s1 + $0x28] sm:$0xff]
      %v307 = vld [vmem:[%s1 + $0x30] sm:$0xff]
      %v308 = vld [vmem:[%s1 + $0x38] sm:$0xff]
      %v309 = vld [vmem:[%s1 + $0x40] sm:$0xff]
      %v310 = vld [vmem:[%s1 + $0x48] sm:$0xff]
      %v311 = vld [vmem:[%s1 + $0x50] sm:$0xff]
      %v312 = vld [vmem:[%s1 + $0x58] sm:$0xff]
      %v313 = vld [vmem:[%s1 + $0x60] sm:$0xff]
      %v314 = vld [vmem:[%s1 + $0x68] sm:$0xff]
      %v315 = vld [vmem:[%s1 + $0x70] sm:$0xff]
      %v316 = vld [vmem:[%s1 + $0x78] sm:$0xff]
      %v317 = vld [vmem:[%s2] sm:$0x1]
      %v318 = vpack.c.bf16 %v286, %v285
      %v319 = vpack.c.bf16 %v288, %v287
      %v320 = vpack.c.bf16 %v290, %v289
      %v321 = vpack.c.bf16 %v292, %v291
      %v322 = vpack.c.bf16 %v294, %v293
      %v323 = vpack.c.bf16 %v296, %v295
      %v324 = vpack.c.bf16 %v298, %v297
      %v325 = vpack.c.bf16 %v300, %v299
      %v326 = vpack.c.bf16 %v302, %v301
      %v327 = vpack.c.bf16 %v304, %v303
      %v328 = vpack.c.bf16 %v306, %v305
      %v329 = vpack.c.bf16 %v308, %v307
      %v330 = vpack.c.bf16 %v310, %v309
      %v331 = vpack.c.bf16 %v312, %v311
      %v332 = vpack.c.bf16 %v314, %v313
      %v333 = vpack.c.bf16 %v316, %v315
      %vm334 = vcmask 261120
      %v336 = vsel %vm334, %v318, 0
      %v339 = vsel %vm334, %v319, 0
      %v342 = vsel %vm334, %v320, 0
      %v345 = vsel %vm334, %v321, 0
      %v348 = vsel %vm334, %v322, 0
      %v351 = vsel %vm334, %v323, 0
      %v354 = vsel %vm334, %v324, 0
      %v357 = vsel %vm334, %v325, 0
      %v360 = vsel %vm334, %v326, 0
      %v363 = vsel %vm334, %v327, 0
      %v366 = vsel %vm334, %v328, 0
      %v369 = vsel %vm334, %v329, 0
      %v372 = vsel %vm334, %v330, 0
      %v375 = vsel %vm334, %v331, 0
      %v378 = vsel %vm334, %v332, 0
      %v381 = vsel %vm334, %v333, 0
      %383 = vmatpush.bf16.xpose.msra.mxu0 %v381
      %384 = vmatpush.bf16.xpose.msra.mxu0 %v378
      %385 = vmatpush.bf16.xpose.msra.mxu0 %v375
      %386 = vmatpush.bf16.xpose.msra.mxu0 %v372
      %387 = vmatpush.bf16.xpose.msra.mxu0 %v369
      %388 = vmatpush.bf16.xpose.msra.mxu0 %v366
      %389 = vmatpush.bf16.xpose.msra.mxu0 %v363
      %390 = vmatpush.bf16.xpose.msra.mxu0 %v360
      %391 = vmatmul.bf16.gmra.mxu0 %v336
      %v392 = vpop.f32.mrf.mxu0
      %v393 = vadd.f32 0.0, %v392
      %v394 = vpop.f32.mrf.mxu0
      %v395 = vadd.f32 0.0, %v394
      %396 = vmatmul.bf16.gmra.mxu0 %v339
      %v397 = vpop.f32.mrf.mxu0
      %v398 = vadd.f32 0.0, %v397
      %v399 = vpop.f32.mrf.mxu0
      %v400 = vadd.f32 0.0, %v399
      %401 = vmatmul.bf16.gmra.mxu0 %v342
      %v402 = vpop.f32.mrf.mxu0
      %v403 = vadd.f32 0.0, %v402
      %v404 = vpop.f32.mrf.mxu0
      %v405 = vadd.f32 0.0, %v404
      %406 = vmatmul.bf16.gmra.mxu0 %v345
      %v407 = vpop.f32.mrf.mxu0
      %v408 = vadd.f32 0.0, %v407
      %v409 = vpop.f32.mrf.mxu0
      %v410 = vadd.f32 0.0, %v409
      %411 = vmatmul.bf16.gmra.mxu0 %v348
      %v412 = vpop.f32.mrf.mxu0
      %v413 = vadd.f32 0.0, %v412
      %v414 = vpop.f32.mrf.mxu0
      %v415 = vadd.f32 0.0, %v414
      %416 = vmatmul.bf16.gmra.mxu0 %v351
      %v417 = vpop.f32.mrf.mxu0
      %v418 = vadd.f32 0.0, %v417
      %v419 = vpop.f32.mrf.mxu0
      %v420 = vadd.f32 0.0, %v419
      %421 = vmatmul.bf16.gmra.mxu0 %v354
      %v422 = vpop.f32.mrf.mxu0
      %v423 = vadd.f32 0.0, %v422
      %v424 = vpop.f32.mrf.mxu0
      %v425 = vadd.f32 0.0, %v424
      %426 = vmatmul.bf16.gmra.mxu0 %v357
      %v427 = vpop.f32.mrf.mxu0
      %v428 = vadd.f32 0.0, %v427
      %v429 = vpop.f32.mrf.mxu0
      %v430 = vadd.f32 0.0, %v429
      %431 = vdwg.mxu0
      %v432 = vmul.f32 %v393, 2.0
      %v433 = vmul.f32 %v395, 2.0
      %v434 = vmul.f32 %v398, 2.0
      %v435 = vmul.f32 %v400, 2.0
      %v436 = vmul.f32 %v403, 2.0
      %v437 = vmul.f32 %v405, 2.0
      %v438 = vmul.f32 %v408, 2.0
      %v439 = vmul.f32 %v410, 2.0
      %v440 = vmul.f32 %v413, 2.0
      %v441 = vmul.f32 %v415, 2.0
      %v442 = vmul.f32 %v418, 2.0
      %v443 = vmul.f32 %v420, 2.0
      %v444 = vmul.f32 %v423, 2.0
      %v445 = vmul.f32 %v425, 2.0
      %v446 = vmul.f32 %v428, 2.0
      %v447 = vmul.f32 %v430, 2.0
      %v449 = vperm.slane %v317, 0
      %v451 = vsub.f32 %v449, %v432
      %v452 = vsub.f32 %v449, %v433
      %v453 = vsub.f32 %v449, %v434
      %v454 = vsub.f32 %v449, %v435
      %v455 = vsub.f32 %v449, %v436
      %v456 = vsub.f32 %v449, %v437
      %v457 = vsub.f32 %v449, %v438
      %v458 = vsub.f32 %v449, %v439
      %v459 = vsub.f32 %v449, %v440
      %v460 = vsub.f32 %v449, %v441
      %v461 = vsub.f32 %v449, %v442
      %v462 = vsub.f32 %v449, %v443
      %v463 = vsub.f32 %v449, %v444
      %v464 = vsub.f32 %v449, %v445
      %v465 = vsub.f32 %v449, %v446
      %v466 = vsub.f32 %v449, %v447
      %467 = vmin.xlane.f32.xlu0 %v451
      %v468 = vpop.xlane.xlu0 %467
      %469 = vmin.xlane.f32.xlu0 %v452
      %v470 = vpop.xlane.xlu0 %469
      %471 = vmin.xlane.f32.xlu0 %v453
      %v472 = vpop.xlane.xlu0 %471
      %473 = vmin.xlane.f32.xlu0 %v454
      %v474 = vpop.xlane.xlu0 %473
      %475 = vmin.xlane.f32.xlu0 %v455
      %v476 = vpop.xlane.xlu0 %475
      %477 = vmin.xlane.f32.xlu0 %v456
      %v478 = vpop.xlane.xlu0 %477
      %479 = vmin.xlane.f32.xlu0 %v457
      %v480 = vpop.xlane.xlu0 %479
      %481 = vmin.xlane.f32.xlu0 %v458
      %v482 = vpop.xlane.xlu0 %481
      %483 = vmin.xlane.f32.xlu0 %v459
      %v484 = vpop.xlane.xlu0 %483
      %485 = vmin.xlane.f32.xlu0 %v460
      %v486 = vpop.xlane.xlu0 %485
      %487 = vmin.xlane.f32.xlu0 %v461
      %v488 = vpop.xlane.xlu0 %487
      %489 = vmin.xlane.f32.xlu0 %v462
      %v490 = vpop.xlane.xlu0 %489
      %491 = vmin.xlane.f32.xlu0 %v463
      %v492 = vpop.xlane.xlu0 %491
      %493 = vmin.xlane.f32.xlu0 %v464
      %v494 = vpop.xlane.xlu0 %493
      %495 = vmin.xlane.f32.xlu0 %v465
      %v496 = vpop.xlane.xlu0 %495
      %497 = vmin.xlane.f32.xlu0 %v466
      %v498 = vpop.xlane.xlu0 %497
      %v499 = vlaneseq
      %v500 = vand.u32 %v499, 127
      %vm501 = vcmp.eq.f32.partialorder %v451, %v468
      %vm502 = vcmp.eq.f32.partialorder %v452, %v470
      %vm503 = vcmp.eq.f32.partialorder %v453, %v472
      %vm504 = vcmp.eq.f32.partialorder %v454, %v474
      %vm505 = vcmp.eq.f32.partialorder %v455, %v476
      %vm506 = vcmp.eq.f32.partialorder %v456, %v478
      %vm507 = vcmp.eq.f32.partialorder %v457, %v480
      %vm508 = vcmp.eq.f32.partialorder %v458, %v482
      %vm509 = vcmp.eq.f32.partialorder %v459, %v484
      %vm510 = vcmp.eq.f32.partialorder %v460, %v486
      %vm511 = vcmp.eq.f32.partialorder %v461, %v488
      %vm512 = vcmp.eq.f32.partialorder %v462, %v490
      %vm513 = vcmp.eq.f32.partialorder %v463, %v492
      %vm514 = vcmp.eq.f32.partialorder %v464, %v494
      %vm515 = vcmp.eq.f32.partialorder %v465, %v496
      %vm516 = vcmp.eq.f32.partialorder %v466, %v498
      %v517 = vsel %vm501, %v500, 128
      %v518 = vsel %vm502, %v500, 128
      %v519 = vsel %vm503, %v500, 128
      %v520 = vsel %vm504, %v500, 128
      %v521 = vsel %vm505, %v500, 128
      %v522 = vsel %vm506, %v500, 128
      %v523 = vsel %vm507, %v500, 128
      %v524 = vsel %vm508, %v500, 128
      %v525 = vsel %vm509, %v500, 128
      %v526 = vsel %vm510, %v500, 128
      %v527 = vsel %vm511, %v500, 128
      %v528 = vsel %vm512, %v500, 128
      %v529 = vsel %vm513, %v500, 128
      %v530 = vsel %vm514, %v500, 128
      %v531 = vsel %vm515, %v500, 128
      %v532 = vsel %vm516, %v500, 128
      %v533 = vand.u32 %v517, 65535
      %v534 = vshra.s32 %v517, 16
      %v535 = vcvt.s32.f32 %v533
      %v536 = vcvt.s32.f32 %v534
      %537 = vmin.xlane.f32.xlu0 %v536
      %v538 = vpop.xlane.xlu0 %537
      %vm539 = vcmp.eq.f32.partialorder %v536, %v538
      %v540 = vsel %vm539, %v535, inf
      %541 = vmin.xlane.f32.xlu0 %v540
      %v542 = vpop.xlane.xlu0 %541
      %v543 = vcvt.f32.s32 %v542
      %v544 = vcvt.f32.s32 %v538
      %v545 = vshll.u32 %v544, 16
      %v546 = vadd.s32 %v545, %v543
      %v547 = vand.u32 %v518, 65535
      %v548 = vshra.s32 %v518, 16
      %v549 = vcvt.s32.f32 %v547
      %v550 = vcvt.s32.f32 %v548
      %551 = vmin.xlane.f32.xlu0 %v550
      %v552 = vpop.xlane.xlu0 %551
      %vm553 = vcmp.eq.f32.partialorder %v550, %v552
      %v554 = vsel %vm553, %v549, inf
      %555 = vmin.xlane.f32.xlu0 %v554
      %v556 = vpop.xlane.xlu0 %555
      %v557 = vcvt.f32.s32 %v556
      %v558 = vcvt.f32.s32 %v552
      %v559 = vshll.u32 %v558, 16
      %v560 = vadd.s32 %v559, %v557
      %v561 = vand.u32 %v519, 65535
      %v562 = vshra.s32 %v519, 16
      %v563 = vcvt.s32.f32 %v561
      %v564 = vcvt.s32.f32 %v562
      %565 = vmin.xlane.f32.xlu0 %v564
      %v566 = vpop.xlane.xlu0 %565
      %vm567 = vcmp.eq.f32.partialorder %v564, %v566
      %v568 = vsel %vm567, %v563, inf
      %569 = vmin.xlane.f32.xlu0 %v568
      %v570 = vpop.xlane.xlu0 %569
      %v571 = vcvt.f32.s32 %v570
      %v572 = vcvt.f32.s32 %v566
      %v573 = vshll.u32 %v572, 16
      %v574 = vadd.s32 %v573, %v571
      %v575 = vand.u32 %v520, 65535
      %v576 = vshra.s32 %v520, 16
      %v577 = vcvt.s32.f32 %v575
      %v578 = vcvt.s32.f32 %v576
      %579 = vmin.xlane.f32.xlu0 %v578
      %v580 = vpop.xlane.xlu0 %579
      %vm581 = vcmp.eq.f32.partialorder %v578, %v580
      %v582 = vsel %vm581, %v577, inf
      %583 = vmin.xlane.f32.xlu0 %v582
      %v584 = vpop.xlane.xlu0 %583
      %v585 = vcvt.f32.s32 %v584
      %v586 = vcvt.f32.s32 %v580
      %v587 = vshll.u32 %v586, 16
      %v588 = vadd.s32 %v587, %v585
      %v589 = vand.u32 %v521, 65535
      %v590 = vshra.s32 %v521, 16
      %v591 = vcvt.s32.f32 %v589
      %v592 = vcvt.s32.f32 %v590
      %593 = vmin.xlane.f32.xlu0 %v592
      %v594 = vpop.xlane.xlu0 %593
      %vm595 = vcmp.eq.f32.partialorder %v592, %v594
      %v596 = vsel %vm595, %v591, inf
      %597 = vmin.xlane.f32.xlu0 %v596
      %v598 = vpop.xlane.xlu0 %597
      %v599 = vcvt.f32.s32 %v598
      %v600 = vcvt.f32.s32 %v594
      %v601 = vshll.u32 %v600, 16
      %v602 = vadd.s32 %v601, %v599
      %v603 = vand.u32 %v522, 65535
      %v604 = vshra.s32 %v522, 16
      %v605 = vcvt.s32.f32 %v603
      %v606 = vcvt.s32.f32 %v604
      %607 = vmin.xlane.f32.xlu0 %v606
      %v608 = vpop.xlane.xlu0 %607
      %vm609 = vcmp.eq.f32.partialorder %v606, %v608
      %v610 = vsel %vm609, %v605, inf
      %611 = vmin.xlane.f32.xlu0 %v610
      %v612 = vpop.xlane.xlu0 %611
      %v613 = vcvt.f32.s32 %v612
      %v614 = vcvt.f32.s32 %v608
      %v615 = vshll.u32 %v614, 16
      %v616 = vadd.s32 %v615, %v613
      %v617 = vand.u32 %v523, 65535
      %v618 = vshra.s32 %v523, 16
      %v619 = vcvt.s32.f32 %v617
      %v620 = vcvt.s32.f32 %v618
      %621 = vmin.xlane.f32.xlu0 %v620
      %v622 = vpop.xlane.xlu0 %621
      %vm623 = vcmp.eq.f32.partialorder %v620, %v622
      %v624 = vsel %vm623, %v619, inf
      %625 = vmin.xlane.f32.xlu0 %v624
      %v626 = vpop.xlane.xlu0 %625
      %v627 = vcvt.f32.s32 %v626
      %v628 = vcvt.f32.s32 %v622
      %v629 = vshll.u32 %v628, 16
      %v630 = vadd.s32 %v629, %v627
      %v631 = vand.u32 %v524, 65535
      %v632 = vshra.s32 %v524, 16
      %v633 = vcvt.s32.f32 %v631
      %v634 = vcvt.s32.f32 %v632
      %635 = vmin.xlane.f32.xlu0 %v634
      %v636 = vpop.xlane.xlu0 %635
      %vm637 = vcmp.eq.f32.partialorder %v634, %v636
      %v638 = vsel %vm637, %v633, inf
      %639 = vmin.xlane.f32.xlu0 %v638
      %v640 = vpop.xlane.xlu0 %639
      %v641 = vcvt.f32.s32 %v640
      %v642 = vcvt.f32.s32 %v636
      %v643 = vshll.u32 %v642, 16
      %v644 = vadd.s32 %v643, %v641
      %v645 = vand.u32 %v525, 65535
      %v646 = vshra.s32 %v525, 16
      %v647 = vcvt.s32.f32 %v645
      %v648 = vcvt.s32.f32 %v646
      %649 = vmin.xlane.f32.xlu0 %v648
      %v650 = vpop.xlane.xlu0 %649
      %vm651 = vcmp.eq.f32.partialorder %v648, %v650
      %v652 = vsel %vm651, %v647, inf
      %653 = vmin.xlane.f32.xlu0 %v652
      %v654 = vpop.xlane.xlu0 %653
      %v655 = vcvt.f32.s32 %v654
      %v656 = vcvt.f32.s32 %v650
      %v657 = vshll.u32 %v656, 16
      %v658 = vadd.s32 %v657, %v655
      %v659 = vand.u32 %v526, 65535
      %v660 = vshra.s32 %v526, 16
      %v661 = vcvt.s32.f32 %v659
      %v662 = vcvt.s32.f32 %v660
      %663 = vmin.xlane.f32.xlu0 %v662
      %v664 = vpop.xlane.xlu0 %663
      %vm665 = vcmp.eq.f32.partialorder %v662, %v664
      %v666 = vsel %vm665, %v661, inf
      %667 = vmin.xlane.f32.xlu0 %v666
      %v668 = vpop.xlane.xlu0 %667
      %v669 = vcvt.f32.s32 %v668
      %v670 = vcvt.f32.s32 %v664
      %v671 = vshll.u32 %v670, 16
      %v672 = vadd.s32 %v671, %v669
      %v673 = vand.u32 %v527, 65535
      %v674 = vshra.s32 %v527, 16
      %v675 = vcvt.s32.f32 %v673
      %v676 = vcvt.s32.f32 %v674
      %677 = vmin.xlane.f32.xlu0 %v676
      %v678 = vpop.xlane.xlu0 %677
      %vm679 = vcmp.eq.f32.partialorder %v676, %v678
      %v680 = vsel %vm679, %v675, inf
      %681 = vmin.xlane.f32.xlu0 %v680
      %v682 = vpop.xlane.xlu0 %681
      %v683 = vcvt.f32.s32 %v682
      %v684 = vcvt.f32.s32 %v678
      %v685 = vshll.u32 %v684, 16
      %v686 = vadd.s32 %v685, %v683
      %v687 = vand.u32 %v528, 65535
      %v688 = vshra.s32 %v528, 16
      %v689 = vcvt.s32.f32 %v687
      %v690 = vcvt.s32.f32 %v688
      %691 = vmin.xlane.f32.xlu0 %v690
      %v692 = vpop.xlane.xlu0 %691
      %vm693 = vcmp.eq.f32.partialorder %v690, %v692
      %v694 = vsel %vm693, %v689, inf
      %695 = vmin.xlane.f32.xlu0 %v694
      %v696 = vpop.xlane.xlu0 %695
      %v697 = vcvt.f32.s32 %v696
      %v698 = vcvt.f32.s32 %v692
      %v699 = vshll.u32 %v698, 16
      %v700 = vadd.s32 %v699, %v697
      %v701 = vand.u32 %v529, 65535
      %v702 = vshra.s32 %v529, 16
      %v703 = vcvt.s32.f32 %v701
      %v704 = vcvt.s32.f32 %v702
      %705 = vmin.xlane.f32.xlu0 %v704
      %v706 = vpop.xlane.xlu0 %705
      %vm707 = vcmp.eq.f32.partialorder %v704, %v706
      %v708 = vsel %vm707, %v703, inf
      %709 = vmin.xlane.f32.xlu0 %v708
      %v710 = vpop.xlane.xlu0 %709
      %v711 = vcvt.f32.s32 %v710
      %v712 = vcvt.f32.s32 %v706
      %v713 = vshll.u32 %v712, 16
      %v714 = vadd.s32 %v713, %v711
      %v715 = vand.u32 %v530, 65535
      %v716 = vshra.s32 %v530, 16
      %v717 = vcvt.s32.f32 %v715
      %v718 = vcvt.s32.f32 %v716
      %719 = vmin.xlane.f32.xlu0 %v718
      %v720 = vpop.xlane.xlu0 %719
      %vm721 = vcmp.eq.f32.partialorder %v718, %v720
      %v722 = vsel %vm721, %v717, inf
      %723 = vmin.xlane.f32.xlu0 %v722
      %v724 = vpop.xlane.xlu0 %723
      %v725 = vcvt.f32.s32 %v724
      %v726 = vcvt.f32.s32 %v720
      %v727 = vshll.u32 %v726, 16
      %v728 = vadd.s32 %v727, %v725
      %v729 = vand.u32 %v531, 65535
      %v730 = vshra.s32 %v531, 16
      %v731 = vcvt.s32.f32 %v729
      %v732 = vcvt.s32.f32 %v730
      %733 = vmin.xlane.f32.xlu0 %v732
      %v734 = vpop.xlane.xlu0 %733
      %vm735 = vcmp.eq.f32.partialorder %v732, %v734
      %v736 = vsel %vm735, %v731, inf
      %737 = vmin.xlane.f32.xlu0 %v736
      %v738 = vpop.xlane.xlu0 %737
      %v739 = vcvt.f32.s32 %v738
      %v740 = vcvt.f32.s32 %v734
      %v741 = vshll.u32 %v740, 16
      %v742 = vadd.s32 %v741, %v739
      %v743 = vand.u32 %v532, 65535
      %v744 = vshra.s32 %v532, 16
      %v745 = vcvt.s32.f32 %v743
      %v746 = vcvt.s32.f32 %v744
      %747 = vmin.xlane.f32.xlu0 %v746
      %v748 = vpop.xlane.xlu0 %747
      %vm749 = vcmp.eq.f32.partialorder %v746, %v748
      %v750 = vsel %vm749, %v745, inf
      %751 = vmin.xlane.f32.xlu0 %v750
      %v752 = vpop.xlane.xlu0 %751
      %v753 = vcvt.f32.s32 %v752
      %v754 = vcvt.f32.s32 %v748
      %v755 = vshll.u32 %v754, 16
      %v756 = vadd.s32 %v755, %v753
      %vm757 = vcmp.eq.s32.totalorder %v500, %v546
      %vm758 = vcmp.eq.s32.totalorder %v500, %v560
      %vm759 = vcmp.eq.s32.totalorder %v500, %v574
      %vm760 = vcmp.eq.s32.totalorder %v500, %v588
      %vm761 = vcmp.eq.s32.totalorder %v500, %v602
      %vm762 = vcmp.eq.s32.totalorder %v500, %v616
      %vm763 = vcmp.eq.s32.totalorder %v500, %v630
      %vm764 = vcmp.eq.s32.totalorder %v500, %v644
      %vm765 = vcmp.eq.s32.totalorder %v500, %v658
      %vm766 = vcmp.eq.s32.totalorder %v500, %v672
      %vm767 = vcmp.eq.s32.totalorder %v500, %v686
      %vm768 = vcmp.eq.s32.totalorder %v500, %v700
      %vm769 = vcmp.eq.s32.totalorder %v500, %v714
      %vm770 = vcmp.eq.s32.totalorder %v500, %v728
      %vm771 = vcmp.eq.s32.totalorder %v500, %v742
      %vm772 = vcmp.eq.s32.totalorder %v500, %v756
      %v773 = vsel %vm757, 1, 0
      %v774 = vsel %vm758, 1, 0
      %v775 = vsel %vm759, 1, 0
      %v776 = vsel %vm760, 1, 0
      %v777 = vsel %vm761, 1, 0
      %v778 = vsel %vm762, 1, 0
      %v779 = vsel %vm763, 1, 0
      %v780 = vsel %vm764, 1, 0
      %v781 = vsel %vm765, 1, 0
      %v782 = vsel %vm766, 1, 0
      %v783 = vsel %vm767, 1, 0
      %v784 = vsel %vm768, 1, 0
      %v785 = vsel %vm769, 1, 0
      %v786 = vsel %vm770, 1, 0
      %v787 = vsel %vm771, 1, 0
      %v788 = vsel %vm772, 1, 0
      %v789 = vcvt.s32.f32 %v773
      %v790 = vcvt.s32.f32 %v774
      %v791 = vcvt.s32.f32 %v775
      %v792 = vcvt.s32.f32 %v776
      %v793 = vcvt.s32.f32 %v777
      %v794 = vcvt.s32.f32 %v778
      %v795 = vcvt.s32.f32 %v779
      %v796 = vcvt.s32.f32 %v780
      %v797 = vcvt.s32.f32 %v781
      %v798 = vcvt.s32.f32 %v782
      %v799 = vcvt.s32.f32 %v783
      %v800 = vcvt.s32.f32 %v784
      %v801 = vcvt.s32.f32 %v785
      %v802 = vcvt.s32.f32 %v786
      %v803 = vcvt.s32.f32 %v787
      %v804 = vcvt.s32.f32 %v788
      %805 = vmatpush.msra.mxu0 %v316
      %806 = vmatpush.msra.mxu0 %v315
      %807 = vmatpush.msra.mxu0 %v314
      %808 = vmatpush.msra.mxu0 %v313
      %809 = vmatpush.msra.mxu0 %v312
      %810 = vmatpush.msra.mxu0 %v311
      %811 = vmatpush.msra.mxu0 %v310
      %812 = vmatpush.msra.mxu0 %v309
      %813 = vmatpush.msra.mxu0 %v308
      %814 = vmatpush.msra.mxu0 %v307
      %815 = vmatpush.msra.mxu0 %v306
      %816 = vmatpush.msra.mxu0 %v305
      %817 = vmatpush.msra.mxu0 %v304
      %818 = vmatpush.msra.mxu0 %v303
      %819 = vmatpush.msra.mxu0 %v302
      %820 = vmatpush.msra.mxu0 %v301
      %821 = vmatmul.f32.gmra.mxu0 %v789
      %v822 = vpop.f32.mrf.mxu0
      %v823 = vadd.f32 0.0, %v822
      %824 = vmatmul.f32.gmra.mxu0 %v790
      %v825 = vpop.f32.mrf.mxu0
      %v826 = vadd.f32 0.0, %v825
      %827 = vmatmul.f32.gmra.mxu0 %v791
      %v828 = vpop.f32.mrf.mxu0
      %v829 = vadd.f32 0.0, %v828
      %830 = vmatmul.f32.gmra.mxu0 %v792
      %v831 = vpop.f32.mrf.mxu0
      %v832 = vadd.f32 0.0, %v831
      %833 = vmatmul.f32.gmra.mxu0 %v793
      %v834 = vpop.f32.mrf.mxu0
      %v835 = vadd.f32 0.0, %v834
      %836 = vmatmul.f32.gmra.mxu0 %v794
      %v837 = vpop.f32.mrf.mxu0
      %v838 = vadd.f32 0.0, %v837
      %839 = vmatmul.f32.gmra.mxu0 %v795
      %v840 = vpop.f32.mrf.mxu0
      %v841 = vadd.f32 0.0, %v840
      %842 = vmatmul.f32.gmra.mxu0 %v796
      %v843 = vpop.f32.mrf.mxu0
      %v844 = vadd.f32 0.0, %v843
      %845 = vmatmul.f32.gmra.mxu0 %v797
      %v846 = vpop.f32.mrf.mxu0
      %v847 = vadd.f32 0.0, %v846
      %848 = vmatmul.f32.gmra.mxu0 %v798
      %v849 = vpop.f32.mrf.mxu0
      %v850 = vadd.f32 0.0, %v849
      %851 = vmatmul.f32.gmra.mxu0 %v799
      %v852 = vpop.f32.mrf.mxu0
      %v853 = vadd.f32 0.0, %v852
      %854 = vmatmul.f32.gmra.mxu0 %v800
      %v855 = vpop.f32.mrf.mxu0
      %v856 = vadd.f32 0.0, %v855
      %857 = vmatmul.f32.gmra.mxu0 %v801
      %v858 = vpop.f32.mrf.mxu0
      %v859 = vadd.f32 0.0, %v858
      %860 = vmatmul.f32.gmra.mxu0 %v802
      %v861 = vpop.f32.mrf.mxu0
      %v862 = vadd.f32 0.0, %v861
      %863 = vmatmul.f32.gmra.mxu0 %v803
      %v864 = vpop.f32.mrf.mxu0
      %v865 = vadd.f32 0.0, %v864
      %866 = vmatmul.f32.gmra.mxu0 %v804
      %v867 = vpop.f32.mrf.mxu0
      %v868 = vadd.f32 0.0, %v867
      %869 = vdwg.mxu0
      %870 = vst.msk [vmem:[%s271] sm:$0xff] %vm334, %v823
      %871 = vst.msk [vmem:[%s271 + $0x8] sm:$0xff] %vm334, %v826
      %872 = vst.msk [vmem:[%s271 + $0x10] sm:$0xff] %vm334, %v829
      %873 = vst.msk [vmem:[%s271 + $0x18] sm:$0xff] %vm334, %v832
      %874 = vst.msk [vmem:[%s271 + $0x20] sm:$0xff] %vm334, %v835
      %875 = vst.msk [vmem:[%s271 + $0x28] sm:$0xff] %vm334, %v838
      %876 = vst.msk [vmem:[%s271 + $0x30] sm:$0xff] %vm334, %v841
      %877 = vst.msk [vmem:[%s271 + $0x38] sm:$0xff] %vm334, %v844
      %878 = vst.msk [vmem:[%s271 + $0x40] sm:$0xff] %vm334, %v847
      %879 = vst.msk [vmem:[%s271 + $0x48] sm:$0xff] %vm334, %v850
      %880 = vst.msk [vmem:[%s271 + $0x50] sm:$0xff] %vm334, %v853
      %881 = vst.msk [vmem:[%s271 + $0x58] sm:$0xff] %vm334, %v856
      %882 = vst.msk [vmem:[%s271 + $0x60] sm:$0xff] %vm334, %v859
      %883 = vst.msk [vmem:[%s271 + $0x68] sm:$0xff] %vm334, %v862
      %884 = vst.msk [vmem:[%s271 + $0x70] sm:$0xff] %vm334, %v865
      %885 = vst.msk [vmem:[%s271 + $0x78] sm:$0xff] %vm334, %v868
      %vm886 = vcmask 7168
      %887 = vst.msk [vmem:[%s277] sm:$0xff] %vm886, %v546
      %888 = vst.msk [vmem:[%s277 + $0x8] sm:$0xff] %vm886, %v560
      %889 = vst.msk [vmem:[%s277 + $0x10] sm:$0xff] %vm886, %v574
      %890 = vst.msk [vmem:[%s277 + $0x18] sm:$0xff] %vm886, %v588
      %891 = vst.msk [vmem:[%s277 + $0x20] sm:$0xff] %vm886, %v602
      %892 = vst.msk [vmem:[%s277 + $0x28] sm:$0xff] %vm886, %v616
      %893 = vst.msk [vmem:[%s277 + $0x30] sm:$0xff] %vm886, %v630
      %894 = vst.msk [vmem:[%s277 + $0x38] sm:$0xff] %vm886, %v644
      %895 = vst.msk [vmem:[%s277 + $0x40] sm:$0xff] %vm886, %v658
      %896 = vst.msk [vmem:[%s277 + $0x48] sm:$0xff] %vm886, %v672
      %897 = vst.msk [vmem:[%s277 + $0x50] sm:$0xff] %vm886, %v686
      %898 = vst.msk [vmem:[%s277 + $0x58] sm:$0xff] %vm886, %v700
      %899 = vst.msk [vmem:[%s277 + $0x60] sm:$0xff] %vm886, %v714
      %900 = vst.msk [vmem:[%s277 + $0x68] sm:$0xff] %vm886, %v728
      %901 = vst.msk [vmem:[%s277 + $0x70] sm:$0xff] %vm886, %v742
      %902 = vst.msk [vmem:[%s277 + $0x78] sm:$0xff] %vm886, %v756
      %v903 = vsub.f32 %v823, %v285
      %v904 = vsub.f32 %v826, %v286
      %v905 = vsub.f32 %v829, %v287
      %v906 = vsub.f32 %v832, %v288
      %v907 = vsub.f32 %v835, %v289
      %v908 = vsub.f32 %v838, %v290
      %v909 = vsub.f32 %v841, %v291
      %v910 = vsub.f32 %v844, %v292
      %v911 = vsub.f32 %v847, %v293
      %v912 = vsub.f32 %v850, %v294
      %v913 = vsub.f32 %v853, %v295
      %v914 = vsub.f32 %v856, %v296
      %v915 = vsub.f32 %v859, %v297
      %v916 = vsub.f32 %v862, %v298
      %v917 = vsub.f32 %v865, %v299
      %v918 = vsub.f32 %v868, %v300
      %s919 = smul.u32 %s18, 128
      %v920 = vlaneseq
      %v921 = vshrl.u32 %v920, 7
      %v922 = vadd.s32 %v921, 8
      %v923 = vadd.s32 %v921, 16
      %v924 = vadd.s32 %v921, 24
      %v925 = vadd.s32 %v921, 32
      %v926 = vadd.s32 %v921, 40
      %v927 = vadd.s32 %v921, 48
      %v928 = vadd.s32 %v921, 56
      %v929 = vadd.s32 %v921, 64
      %v930 = vadd.s32 %v921, 72
      %v931 = vadd.s32 %v921, 80
      %v932 = vadd.s32 %v921, 88
      %v933 = vadd.s32 %v921, 96
      %v934 = vadd.s32 %v921, 104
      %v935 = vadd.s32 %v921, 112
      %v936 = vadd.s32 %v921, 120
      %v937 = vstv %s919
      %v938 = vadd.s32 %v937, %v921
      %v939 = vadd.s32 %v937, %v922
      %v940 = vadd.s32 %v937, %v923
      %v941 = vadd.s32 %v937, %v924
      %v942 = vadd.s32 %v937, %v925
      %v943 = vadd.s32 %v937, %v926
      %v944 = vadd.s32 %v937, %v927
      %v945 = vadd.s32 %v937, %v928
      %v946 = vadd.s32 %v937, %v929
      %v947 = vadd.s32 %v937, %v930
      %v948 = vadd.s32 %v937, %v931
      %v949 = vadd.s32 %v937, %v932
      %v950 = vadd.s32 %v937, %v933
      %v951 = vadd.s32 %v937, %v934
      %v952 = vadd.s32 %v937, %v935
      %v953 = vadd.s32 %v937, %v936
      %vm954 = vcmp.lt.s32.totalorder %v938, 288
      %vm955 = vcmp.lt.s32.totalorder %v939, 288
      %vm956 = vcmp.lt.s32.totalorder %v940, 288
      %vm957 = vcmp.lt.s32.totalorder %v941, 288
      %vm958 = vcmp.lt.s32.totalorder %v942, 288
      %vm959 = vcmp.lt.s32.totalorder %v943, 288
      %vm960 = vcmp.lt.s32.totalorder %v944, 288
      %vm961 = vcmp.lt.s32.totalorder %v945, 288
      %vm962 = vcmp.lt.s32.totalorder %v946, 288
      %vm963 = vcmp.lt.s32.totalorder %v947, 288
      %vm964 = vcmp.lt.s32.totalorder %v948, 288
      %vm965 = vcmp.lt.s32.totalorder %v949, 288
      %vm966 = vcmp.lt.s32.totalorder %v950, 288
      %vm967 = vcmp.lt.s32.totalorder %v951, 288
      %vm968 = vcmp.lt.s32.totalorder %v952, 288
      %vm969 = vcmp.lt.s32.totalorder %v953, 288
      %v970 = vsel %vm954, 1, 0
      %v971 = vsel %vm955, 1, 0
      %v972 = vsel %vm956, 1, 0
      %v973 = vsel %vm957, 1, 0
      %v974 = vsel %vm958, 1, 0
      %v975 = vsel %vm959, 1, 0
      %v976 = vsel %vm960, 1, 0
      %v977 = vsel %vm961, 1, 0
      %v978 = vsel %vm962, 1, 0
      %v979 = vsel %vm963, 1, 0
      %v980 = vsel %vm964, 1, 0
      %v981 = vsel %vm965, 1, 0
      %v982 = vsel %vm966, 1, 0
      %v983 = vsel %vm967, 1, 0
      %v984 = vsel %vm968, 1, 0
      %v985 = vsel %vm969, 1, 0
      %v986 = vcvt.s32.f32 %v970
      %v987 = vcvt.s32.f32 %v971
      %v988 = vcvt.s32.f32 %v972
      %v989 = vcvt.s32.f32 %v973
      %v990 = vcvt.s32.f32 %v974
      %v991 = vcvt.s32.f32 %v975
      %v992 = vcvt.s32.f32 %v976
      %v993 = vcvt.s32.f32 %v977
      %v994 = vcvt.s32.f32 %v978
      %v995 = vcvt.s32.f32 %v979
      %v996 = vcvt.s32.f32 %v980
      %v997 = vcvt.s32.f32 %v981
      %v998 = vcvt.s32.f32 %v982
      %v999 = vcvt.s32.f32 %v983
      %v1000 = vcvt.s32.f32 %v984
      %v1001 = vcvt.s32.f32 %v985
      %v1002 = vmul.f32 %v789, %v986
      %v1003 = vmul.f32 %v790, %v987
      %v1004 = vmul.f32 %v791, %v988
      %v1005 = vmul.f32 %v792, %v989
      %v1006 = vmul.f32 %v793, %v990
      %v1007 = vmul.f32 %v794, %v991
      %v1008 = vmul.f32 %v795, %v992
      %v1009 = vmul.f32 %v796, %v993
      %v1010 = vmul.f32 %v797, %v994
      %v1011 = vmul.f32 %v798, %v995
      %v1012 = vmul.f32 %v799, %v996
      %v1013 = vmul.f32 %v800, %v997
      %v1014 = vmul.f32 %v801, %v998
      %v1015 = vmul.f32 %v802, %v999
      %v1016 = vmul.f32 %v803, %v1000
      %v1017 = vmul.f32 %v804, %v1001
      %v1018 = vmul.f32 %v903, %v986
      %v1019 = vmul.f32 %v904, %v987
      %v1020 = vmul.f32 %v905, %v988
      %v1021 = vmul.f32 %v906, %v989
      %v1022 = vmul.f32 %v907, %v990
      %v1023 = vmul.f32 %v908, %v991
      %v1024 = vmul.f32 %v909, %v992
      %v1025 = vmul.f32 %v910, %v993
      %v1026 = vmul.f32 %v911, %v994
      %v1027 = vmul.f32 %v912, %v995
      %v1028 = vmul.f32 %v913, %v996
      %v1029 = vmul.f32 %v914, %v997
      %v1030 = vmul.f32 %v915, %v998
      %v1031 = vmul.f32 %v916, %v999
      %v1032 = vmul.f32 %v917, %v1000
      %v1033 = vmul.f32 %v918, %v1001
      %v1034 = vmul.f32 %v1018, %v1018
      %v1035 = vmul.f32 %v1019, %v1019
      %v1036 = vmul.f32 %v1020, %v1020
      %v1037 = vmul.f32 %v1021, %v1021
      %v1038 = vmul.f32 %v1022, %v1022
      %v1039 = vmul.f32 %v1023, %v1023
      %v1040 = vmul.f32 %v1024, %v1024
      %v1041 = vmul.f32 %v1025, %v1025
      %v1042 = vmul.f32 %v1026, %v1026
      %v1043 = vmul.f32 %v1027, %v1027
      %v1044 = vmul.f32 %v1028, %v1028
      %v1045 = vmul.f32 %v1029, %v1029
      %v1046 = vmul.f32 %v1030, %v1030
      %v1047 = vmul.f32 %v1031, %v1031
      %v1048 = vmul.f32 %v1032, %v1032
      %v1049 = vmul.f32 %v1033, %v1033
      %v1050 = vsel %vm334, %v1034, 0.0
      %v1051 = vsel %vm334, %v1035, 0.0
      %v1052 = vadd.f32 %v1050, %v1051
      %v1053 = vsel %vm334, %v1036, 0.0
      %v1054 = vadd.f32 %v1052, %v1053
      %v1055 = vsel %vm334, %v1037, 0.0
      %v1056 = vadd.f32 %v1054, %v1055
      %v1057 = vsel %vm334, %v1038, 0.0
      %v1058 = vadd.f32 %v1056, %v1057
      %v1059 = vsel %vm334, %v1039, 0.0
      %v1060 = vadd.f32 %v1058, %v1059
      %v1061 = vsel %vm334, %v1040, 0.0
      %v1062 = vadd.f32 %v1060, %v1061
      %v1063 = vsel %vm334, %v1041, 0.0
      %v1064 = vadd.f32 %v1062, %v1063
      %v1065 = vsel %vm334, %v1042, 0.0
      %v1066 = vadd.f32 %v1064, %v1065
      %v1067 = vsel %vm334, %v1043, 0.0
      %v1068 = vadd.f32 %v1066, %v1067
      %v1069 = vsel %vm334, %v1044, 0.0
      %v1070 = vadd.f32 %v1068, %v1069
      %v1071 = vsel %vm334, %v1045, 0.0
      %v1072 = vadd.f32 %v1070, %v1071
      %v1073 = vsel %vm334, %v1046, 0.0
      %v1074 = vadd.f32 %v1072, %v1073
      %v1075 = vsel %vm334, %v1047, 0.0
      %v1076 = vadd.f32 %v1074, %v1075
      %v1077 = vsel %vm334, %v1048, 0.0
      %v1078 = vadd.f32 %v1076, %v1077
      %v1079 = vsel %vm334, %v1049, 0.0
      %v1080 = vadd.f32 %v1078, %v1079
      %1081 = vadd.xlane.f32.xlu0 %v1080
      %v1082 = vpop.xlane.xlu0 %1081
      %v1083 = vrot.slane %v1082, 4
      %v1084 = vadd.f32 %v1082, %v1083
      %v1085 = vrot.slane %v1084, 2
      %v1086 = vadd.f32 %v1084, %v1085
      %v1087 = vrot.slane %v1086, 1
      %v1088 = vadd.f32 %v1086, %v1087
      %s1089 = vtos %v1088
      %v1090 = vstv %s1089
      %vm1091 = vcmask 0
      %1092 = vst.msk [vmem:[%s281] sm:$0x1] %vm1091, %v1090
      %v1093 = vadd.f32 %v1002, %v1003
      %v1094 = vadd.f32 %v1093, %v1004
      %v1095 = vadd.f32 %v1094, %v1005
      %v1096 = vadd.f32 %v1095, %v1006
      %v1097 = vadd.f32 %v1096, %v1007
      %v1098 = vadd.f32 %v1097, %v1008
      %v1099 = vadd.f32 %v1098, %v1009
      %v1100 = vadd.f32 %v1099, %v1010
      %v1101 = vadd.f32 %v1100, %v1011
      %v1102 = vadd.f32 %v1101, %v1012
      %v1103 = vadd.f32 %v1102, %v1013
      %v1104 = vadd.f32 %v1103, %v1014
      %v1105 = vadd.f32 %v1104, %v1015
      %v1106 = vadd.f32 %v1105, %v1016
      %v1107 = vadd.f32 %v1106, %v1017
      %v1108 = vrot.slane %v1107, 4
      %v1109 = vadd.f32 %v1107, %v1108
      %v1110 = vrot.slane %v1109, 2
      %v1111 = vadd.f32 %v1109, %v1110
      %v1112 = vrot.slane %v1111, 1
      %v1113 = vadd.f32 %v1111, %v1112
      %1114 = vst [vmem:[%s284] sm:$0x1] %v1113
      %s1115 = smul.u32 16, %s18
      %p1116 = scmp.lt.s32.totalorder %s1115, 47
      %s1117 = scalar_select %p1116, %s1115, 47
      %s1118 = smul.addr %s1117, 8
      %s1119 = scalar_lea.vmem %s3, %s1118
      %s1120 = smul.u32 16, %s18
      %p1121 = scmp.lt.s32.totalorder %s1120, 47
      %s1122 = scalar_select %p1121, %s1120, 47
      %s1123 = smul.addr %s1122, 8
      %s1124 = scalar_lea.vmem %s4, %s1123
      %p1125 = scmp.lt.s32.totalorder %s18, 2
      %s1126 = scalar_select %p1125, %s18, 2
      %s1127 = scalar_lea.vmem %s5, %s1126
      %p1128 = scmp.lt.s32.totalorder %s18, 2
      %s1129 = scalar_select %p1128, %s18, 2
      %s1130 = scalar_lea.vmem %s6, %s1129
      // Predicated region
      $region33: #{vector_quantizer_ema_forward.1} parent=31 // pred_check
        %p1131 = pneg %p104
      $region34: #{vector_quantizer_ema_forward.1} parent=31 // pred_check_branch
        %1133 = sbr.rel (%p1131) target = $region36
      $region35: #{vector_quantizer_ema_forward.1} parent=31 // pred_region
        %s1134 = smul.u32 16, %s18
      $region36: #{vector_quantizer_ema_forward.1} parent=31 // pred_fallthru
        _
      // Predicated region
      $region37: #{vector_quantizer_ema_forward.1} parent=31 // pred_check
        %p1135 = pneg %p130
      $region38: #{vector_quantizer_ema_forward.1} parent=31 // pred_check_branch
        %1137 = sbr.rel (%p1135) target = $region40
      $region39: #{vector_quantizer_ema_forward.1} parent=31 // pred_region
        %s1138 = smul.u32 16, %s18
      $region40: #{vector_quantizer_ema_forward.1} parent=31 // pred_fallthru
        _
      // Predicated region
      $region41: #{vector_quantizer_ema_forward.1} parent=31 // pred_check
        %p1139 = pneg %p156
      $region42: #{vector_quantizer_ema_forward.1} parent=31 // pred_check_branch
        %1141 = sbr.rel (%p1139) target = $region44
      $region43: #{vector_quantizer_ema_forward.1} parent=31 // pred_region
        _
      $region44: #{vector_quantizer_ema_forward.1} parent=31 // pred_fallthru
        _
      // Predicated region
      $region45: #{vector_quantizer_ema_forward.1} parent=31 // pred_check
        %p1142 = pneg %p182
      $region46: #{vector_quantizer_ema_forward.1} parent=31 // pred_check_branch
        %1144 = sbr.rel (%p1142) target = $region48
      $region47: #{vector_quantizer_ema_forward.1} parent=31 // pred_region
        _
      $region48: #{vector_quantizer_ema_forward.1} parent=31 // pred_fallthru
        _
    $region32: #{vector_quantizer_ema_forward.1} parent=5 // pred_fallthru
      _
    %p1145 = scmp.le.s32.totalorder 2, %s13
    // Predicated region
    $region49: #{vector_quantizer_ema_forward.1} parent=5 // pred_check
      %p1146 = pneg %p1145
    $region50: #{vector_quantizer_ema_forward.1} parent=5 // pred_check_branch
      %1148 = sbr.rel (%p1146) target = $region52
    $region51: #{vector_quantizer_ema_forward.1} parent=5 // pred_region
      %s1149 = ssub.s32 %s13, 2
      // Predicated region
      $region53: #{vector_quantizer_ema_forward.1} parent=51 // pred_check
        %p1150 = pneg %p110
      $region54: #{vector_quantizer_ema_forward.1} parent=51 // pred_check_branch
        %1152 = sbr.rel (%p1150) target = $region56
      $region55: #{vector_quantizer_ema_forward.1} parent=51 // pred_region
        %s1153 = smul.u32 16, %s19
        %p1154 = scmp.lt.s32.totalorder %s1153, 47
        %s1155 = scalar_select %p1154, %s1153, 47
        %s1156 = smul.addr %s1155, 8
        %s1157 = scalar_lea.vmem %s3, %s1156
      $region56: #{vector_quantizer_ema_forward.1} parent=51 // pred_fallthru
        _
      // Predicated region
      $region57: #{vector_quantizer_ema_forward.1} parent=51 // pred_check
        %p1158 = pneg %p136
      $region58: #{vector_quantizer_ema_forward.1} parent=51 // pred_check_branch
        %1160 = sbr.rel (%p1158) target = $region60
      $region59: #{vector_quantizer_ema_forward.1} parent=51 // pred_region
        %s1161 = smul.u32 16, %s19
        %p1162 = scmp.lt.s32.totalorder %s1161, 47
        %s1163 = scalar_select %p1162, %s1161, 47
        %s1164 = smul.addr %s1163, 8
        %s1165 = scalar_lea.vmem %s4, %s1164
      $region60: #{vector_quantizer_ema_forward.1} parent=51 // pred_fallthru
        _
      // Predicated region
      $region61: #{vector_quantizer_ema_forward.1} parent=51 // pred_check
        %p1166 = pneg %p162
      $region62: #{vector_quantizer_ema_forward.1} parent=51 // pred_check_branch
        %1168 = sbr.rel (%p1166) target = $region64
      $region63: #{vector_quantizer_ema_forward.1} parent=51 // pred_region
        %p1169 = scmp.lt.s32.totalorder %s19, 2
        %s1170 = scalar_select %p1169, %s19, 2
        %s1171 = scalar_lea.vmem %s5, %s1170
      $region64: #{vector_quantizer_ema_forward.1} parent=51 // pred_fallthru
        _
      // Predicated region
      $region65: #{vector_quantizer_ema_forward.1} parent=51 // pred_check
        %p1172 = pneg %p188
      $region66: #{vector_quantizer_ema_forward.1} parent=51 // pred_check_branch
        %1174 = sbr.rel (%p1172) target = $region68
      $region67: #{vector_quantizer_ema_forward.1} parent=51 // pred_region
        %p1175 = scmp.lt.s32.totalorder %s19, 2
        %s1176 = scalar_select %p1175, %s19, 2
        %s1177 = scalar_lea.vmem %s6, %s1176
      $region68: #{vector_quantizer_ema_forward.1} parent=51 // pred_fallthru
        _
    $region52: #{vector_quantizer_ema_forward.1} parent=5 // pred_fallthru
      _
  $region6: #{vector_quantizer_ema_forward.1} parent=0 // loop_footer
    %s17 = sadd.s32 1, %s13
  $region7: #{vector_quantizer_ema_forward.1} parent=0 // loop_footer_branch
    %12 = sbr.rel target = $region3
  $region8: #{vector_quantizer_ema_forward.1} parent=0 // loop_exit
    _

</llo_original>
